<compile_context>
chip_gen: v6e
topology: v6e:2x2x1
jax: 0.10.0
libtpu: 0.0.40
codegen_flags: <defaults>
</compile_context>

<pallas_src>
import numpy as np
import jax
import jax.numpy as jnp
from jax import lax
from jax.experimental import pallas as pl
from jax.experimental.pallas import tpu as pltpu

HIGH = jax.lax.Precision.HIGHEST          # only used by the pure-JAX reference
_VMEM_LIMIT = 64 * 1024 * 1024


# --------------------------- tiling helpers -----------------------------------
def _pick_tile(n, cap, quantum=8):
    """Largest `quantum`-multiple divisor of n that is <= cap (n itself if small)."""
    if n <= cap:
        return n
    t = (cap // quantum) * quantum
    while t >= quantum:
        if n % t == 0:
            return t
        t -= quantum
    return n


def _pick_div(n, cap):
    """Largest divisor of n that is <= cap."""
    d = max(1, min(n, cap))
    while n % d:
        d -= 1
    return d


# ----------------------- K1: hoisted input projection -------------------------
def _proj_kernel(x_ref, w_ref, b_ref, gi_ref):
    # x_ref: (tr, F) f32; w_ref: (F, 6Hp) bf16; b_ref: (1, 6Hp) f32
    # gi_ref: (2, tr, 3Hp) f32  (forward gates | backward gates)
    Gp = gi_ref.shape[-1]
    gi6 = jnp.dot(x_ref[...].astype(jnp.bfloat16), w_ref[...],
                  preferred_element_type=jnp.float32) + b_ref[...]
    gi_ref[0] = gi6[:, :Gp]          # lane offsets are multiples of 128 (Hp-padded)
    gi_ref[1] = gi6[:, Gp:]


# ----------------------- K2: chunked bidirectional GRU ------------------------
def _make_gru_chunk_kernel(tc, nch):
    def kernel(gi_ref, whh_ref, bhh_ref, lenf_ref, out_ref, h_ref):
        # gi_ref : (1, tc, B, 3Hp) precomputed x@W_ih^T + b_ih for this (dir, chunk)
        # whh_ref: (1, Hp, 3Hp) bf16 ; bhh_ref: (1, 1, 3Hp) f32
        # lenf_ref: (B, 1) f32 lengths ; out_ref: (1, tc, B, Hp) masked states
        # h_ref  : (B, Hp) carried hidden state (scratch persists across chunks)
        d = pl.program_id(0)
        c = pl.program_id(1)

        # NOTE: correctness relies on the time axis staying "arbitrary"
        # (sequential, in order).  The direction axis is "parallel": VMEM (and
        # therefore this scratch) is private per TensorCore, so a megacore split
        # of the direction axis keeps independent h states.
        @pl.when(c == 0)
        def _init():
            h_ref[...] = jnp.zeros_like(h_ref)

        Hp = h_ref.shape[-1]
        bhh = bhh_ref[0]                            # (1, 3Hp)
        lenf = lenf_ref[...]                        # (B, 1)
        cidx = jnp.where(d == 0, c, nch - 1 - c)    # un-reversed chunk index

        def step(s, h):
            ls = jnp.where(d == 0, s, tc - 1 - s)   # local time inside the chunk
            gi = gi_ref[0, ls]                      # (B, 3Hp)
            gh = jnp.dot(h.astype(jnp.bfloat16), whh_ref[0],
                         preferred_element_type=jnp.float32) + bhh
            r = jax.nn.sigmoid(gi[:, :Hp] + gh[:, :Hp])
            z = jax.nn.sigmoid(gi[:, Hp:2 * Hp] + gh[:, Hp:2 * Hp])
            n = jnp.tanh(gi[:, 2 * Hp:] + r * gh[:, 2 * Hp:])
            h_new = (1.0 - z) * n + z * h
            # Fuse the length mask into the emitted state (the recurrence itself
            # stays unmasked, exactly like nn.GRU over the full sequence).
            tg = (cidx * tc + ls).astype(jnp.float32)
            out_ref[0, ls] = h_new * (lenf > tg).astype(jnp.float32)
            return h_new

        h_ref[...] = lax.fori_loop(0, tc, step, h_ref[...], unroll=True)
    return kernel


def bigru(videos, lengths, prep):
    """videos (B, T, F) -> mask-applied bidirectional GRU states (2, T, B, Hp)."""
    B, T, F = videos.shape
    assert B % 8 == 0, "batch must be a multiple of 8 (sublane alignment)"
    Hp, Gp = prep["Hp"], prep["Gp"]
    R = T * B

    # time-major flat layout: row r = t*B + b
    x_flat = jnp.transpose(videos, (1, 0, 2)).reshape(R, F)

    # ---- K1: input projection, tiled + parallel over rows --------------------
    tr = _pick_tile(R, 512)
    gi = pl.pallas_call(
        _proj_kernel,
        grid=(R // tr,),
        in_specs=[pl.BlockSpec((tr, F), lambda i: (i, 0)),
                  pl.BlockSpec((F, 2 * Gp), lambda i: (0, 0)),
                  pl.BlockSpec((1, 2 * Gp), lambda i: (0, 0))],
        out_specs=pl.BlockSpec((2, tr, Gp), lambda i: (0, i, 0)),
        out_shape=jax.ShapeDtypeStruct((2, R, Gp), jnp.float32),
        compiler_params=pltpu.CompilerParams(
            dimension_semantics=("parallel",),
            vmem_limit_bytes=_VMEM_LIMIT),
    )(x_flat, prep["wih6"], prep["bih6"])

    gi4 = gi.reshape(2, T, B, Gp)       # metadata-only reshape (split leading rows)

    # ---- K2: chunked recurrence ----------------------------------------------
    tc = _pick_div(T, 8)
    nch = T // tc
    lenf = lengths.astype(jnp.float32).reshape(B, 1)

    g = pl.pallas_call(
        _make_gru_chunk_kernel(tc, nch),
        grid=(2, nch),
        in_specs=[pl.BlockSpec((1, tc, B, Gp),
                               lambda d, c: (d, c + d * (nch - 1 - 2 * c), 0, 0)),
                  pl.BlockSpec((1, Hp, Gp), lambda d, c: (d, 0, 0)),
                  pl.BlockSpec((1, 1, Gp), lambda d, c: (d, 0, 0)),
                  pl.BlockSpec((B, 1), lambda d, c: (0, 0))],
        out_specs=pl.BlockSpec((1, tc, B, Hp),
                               lambda d, c: (d, c + d * (nch - 1 - 2 * c), 0, 0)),
        out_shape=jax.ShapeDtypeStruct((2, T, B, Hp), jnp.float32),
        scratch_shapes=[pltpu.VMEM((B, Hp), jnp.float32)],
        compiler_params=pltpu.CompilerParams(
            dimension_semantics=("parallel", "arbitrary"),
            vmem_limit_bytes=_VMEM_LIMIT),
    )(gi4, prep["whh_s"], prep["bhh_s"], lenf)
    return g                            # (2, T, B, Hp), mask already applied


# -------------------- K3: fused pooling + all conv branches -------------------
def _make_pool_conv_kernel(gru_pool, P, W, Hp):
    def kernel(g_ref, invlen_ref, w_ref, b_ref, valid_ref,
               pooled_ref, conv_ref, gpad_ref):
        # g_ref     : (2, T, tb, Hp)  masked GRU states (fwd, bwd), f32
        # invlen_ref: (tb, 1)         1/length (mean pooling)
        # w_ref     : (W, 2Hp, Kp)    stacked conv weights, bf16
        # b_ref     : (1, Kp)         stacked conv bias
        # valid_ref : (To, Kp)        per-position channel validity (left-pad fix)
        # pooled_ref: (tb, 2Hp)       pooled fwd|bwd states (lane-dense)
        # conv_ref  : (tb, Kp)        max-pooled ReLU conv outputs (lane-dense)
        # gpad_ref  : (T+2P, tb, 2Hp) scratch: zero-padded fwd|bwd concat
        T = g_ref.shape[1]
        tb = g_ref.shape[2]
        Kp = b_ref.shape[-1]
        To = T + P

        # ---- GRU pooling: reduction over the leading time axis (VALU only) ---
        if gru_pool == "mean":
            inv = invlen_ref[...]
            pooled_ref[:, :Hp] = jnp.sum(g_ref[0], axis=0) * inv
            pooled_ref[:, Hp:] = jnp.sum(g_ref[1], axis=0) * inv
        else:  # 'max' == torch.max(gru_init_out * mask, 1)
            pooled_ref[:, :Hp] = jnp.max(g_ref[0], axis=0)
            pooled_ref[:, Hp:] = jnp.max(g_ref[1], axis=0)

        # ---- stage zero-padded, lane-concatenated (fwd|bwd) masked states ----
        if P > 0:
            zpad = jnp.zeros((P, tb, 2 * Hp), jnp.float32)
            gpad_ref[0:P] = zpad
            gpad_ref[P + T:] = zpad
        gpad_ref[P:P + T, :, :Hp] = g_ref[0]
        gpad_ref[P:P + T, :, Hp:] = g_ref[1]

        bias = b_ref[...]                           # (1, Kp)

        def window(o):
            acc = jnp.zeros((tb, Kp), jnp.float32)
            for i in range(W):                      # static: one fused 2Hp dot/tap
                acc = acc + jnp.dot(gpad_ref[o + i].astype(jnp.bfloat16),
                                    w_ref[i],
                                    preferred_element_type=jnp.float32)
            return acc

        best = jnp.zeros((tb, Kp), jnp.float32)     # post-ReLU values are >= 0
        # First P positions: smaller kernels' windows may lie entirely inside the
        # synthetic max-width left padding -> mask those channels (valid == 0).
        for o in range(P):                          # static, tiny (P = max_wsz-1)
            y = jnp.maximum(window(o) + bias, 0.0) * valid_ref[o:o + 1]
            best = jnp.maximum(best, y)

        # Remaining T positions: every kernel size is valid.  Bounded unroll keeps
        # only one rolling window of activations live (no per-offset zs arrays).
        def body(o, best):
            y = jnp.maximum(window(o) + bias, 0.0)
            return jnp.maximum(best, y)

        best = lax.fori_loop(P, To, body, best, unroll=2)
        conv_ref[...] = best
    return kernel


def pool_conv(g, lengths, prep, gru_pool):
    _, T, B, Hp = g.shape
    Kp, To, W = prep["Kp"], prep["To"], prep["max_wsz"]
    P = W - 1
    tb = _pick_tile(B, 16)
    invlen = (1.0 / jnp.maximum(lengths.astype(jnp.float32), 1.0)).reshape(B, 1)

    pooled, conv = pl.pallas_call(
        _make_pool_conv_kernel(gru_pool, P, W, Hp),
        grid=(B // tb,),
        in_specs=[pl.BlockSpec((2, T, tb, Hp), lambda j: (0, 0, j, 0)),
                  pl.BlockSpec((tb, 1), lambda j: (j, 0)),
                  pl.BlockSpec((W, 2 * Hp, Kp), lambda j: (0, 0, 0)),
                  pl.BlockSpec((1, Kp), lambda j: (0, 0)),
                  pl.BlockSpec((To, Kp), lambda j: (0, 0))],
        out_specs=(pl.BlockSpec((tb, 2 * Hp), lambda j: (j, 0)),
                   pl.BlockSpec((tb, Kp), lambda j: (j, 0))),
        out_shape=(jax.ShapeDtypeStruct((B, 2 * Hp), jnp.float32),
                   jax.ShapeDtypeStruct((B, Kp), jnp.float32)),
        scratch_shapes=[pltpu.VMEM((T + 2 * P, tb, 2 * Hp), jnp.float32)],
        compiler_params=pltpu.CompilerParams(
            dimension_semantics=("parallel",),
            vmem_limit_bytes=_VMEM_LIMIT),
    )(g, invlen, prep["w_stack"], prep["b_stack"], prep["valid"])
    return pooled, conv


# ----------------------- one-time parameter preparation ------------------------
def prepare_params(params, T):
    """Pad H to a lane multiple, stack/transpose weights once (bf16), outside
    the per-call path."""
    H = params["W_hh_f"].shape[1]
    F = params["W_ih_f"].shape[1]
    Hp = ((H + 127) // 128) * 128
    Gp = 3 * Hp

    def pack_ih(Wih, bih):
        w = np.zeros((F, Gp), np.float32)
        b = np.zeros((Gp,), np.float32)
        Wih = np.asarray(Wih); bih = np.asarray(bih)
        for g in range(3):
            w[:, g * Hp:g * Hp + H] = Wih[g * H:(g + 1) * H, :].T
            b[g * Hp:g * Hp + H] = bih[g * H:(g + 1) * H]
        return w, b

    def pack_hh(Whh, bhh):
        w = np.zeros((Hp, Gp), np.float32)
        b = np.zeros((Gp,), np.float32)
        Whh = np.asarray(Whh); bhh = np.asarray(bhh)
        for g in range(3):
            w[:H, g * Hp:g * Hp + H] = Whh[g * H:(g + 1) * H, :].T
            b[g * Hp:g * Hp + H] = bhh[g * H:(g + 1) * H]
        return w, b

    wf, bf = pack_ih(params["W_ih_f"], params["b_ih_f"])
    wb, bb = pack_ih(params["W_ih_b"], params["b_ih_b"])
    whf, bhf = pack_hh(params["W_hh_f"], params["b_hh_f"])
    whb, bhb = pack_hh(params["W_hh_b"], params["b_hh_b"])

    wih6 = jnp.asarray(np.concatenate([wf, wb], axis=1), jnp.bfloat16)    # (F, 6Hp)
    bih6 = jnp.asarray(np.concatenate([bf, bb])[None, :], jnp.float32)    # (1, 6Hp)
    whh_s = jnp.asarray(np.stack([whf, whb]), jnp.bfloat16)               # (2, Hp, 3Hp)
    bhh_s = jnp.asarray(np.stack([bhf[None], bhb[None]]), jnp.float32)    # (2, 1, 3Hp)

    sizes = [Wc.shape[2] for Wc, _ in params["convs"]]
    ks = [Wc.shape[0] for Wc, _ in params["convs"]]
    max_wsz = max(sizes)
    P = max_wsz - 1
    To = T + P
    k_total = sum(ks)
    Kp = max(128, ((k_total + 127) // 128) * 128)   # lane-dense conv output dim

    w_stack = np.zeros((max_wsz, 2 * Hp, Kp), np.float32)
    b_stack = np.zeros((1, Kp), np.float32)
    valid = np.ones((To, Kp), np.float32)
    off = 0
    for (Wc, bc), wsz, k in zip(params["convs"], sizes, ks):
        Wc_np = np.asarray(Wc)                      # (k, 1, wsz, 2H)
        for i in range(wsz):
            w_stack[i, :H, off:off + k] = Wc_np[:, 0, i, :H].T        # fwd half
            w_stack[i, Hp:Hp + H, off:off + k] = Wc_np[:, 0, i, H:].T  # bwd half
        b_stack[0, off:off + k] = np.asarray(bc)
        # positions whose window for a smaller-than-max kernel lies entirely in
        # the synthetic left zero padding would leak relu(bias): mask them out.
        if P - wsz + 1 > 0:
            valid[:P - wsz + 1, off:off + k] = 0.0
        off += k

    return dict(H=H, Hp=Hp, Gp=Gp, k_total=k_total, Kp=Kp, To=To, max_wsz=max_wsz,
                wih6=wih6, bih6=bih6, whh_s=whh_s, bhh_s=bhh_s,
                w_stack=jnp.asarray(w_stack, jnp.bfloat16),
                b_stack=jnp.asarray(b_stack),
                valid=jnp.asarray(valid))


# ------------------------------- full forward ----------------------------------
def video_multilevel_encoding(videos, videos_origin, lengths, videos_mask, prep,
                              gru_pool="mean", concate="full"):
    # videos_mask is accepted for interface parity with the PyTorch module; the
    # kernels derive the identical length mask from `lengths` inside K2 instead
    # of shipping a lane-1 (T*B, 1) mask array to HBM/VMEM.
    del videos_mask
    H, Hp = prep["H"], prep["Hp"]
    g = bigru(videos, lengths, prep)                              # (2, T, B, Hp)
    pooled, conv = pool_conv(g, lengths, prep, gru_pool)
    gru_out = jnp.concatenate([pooled[:, :H], pooled[:, Hp:Hp + H]], axis=1)
    con_out = conv[:, :prep["k_total"]]
    # dropout is identity at inference time
    if concate == "full":
        return jnp.concatenate([gru_out, con_out, videos_origin], axis=1)
    return jnp.concatenate([gru_out, con_out], axis=1)


# ----------------------------- pure-JAX reference -------------------------------
def ref_forward(videos, videos_origin, lengths_list, videos_mask, params,
                gru_pool="mean", concate="full"):
    B, T, F = videos.shape
    H = params["W_hh_f"].shape[1]

    def run_dir(Wih, Whh, bih, bhh, reverse):
        h = jnp.zeros((B, H), jnp.float32)
        outs = [None] * T
        order = range(T - 1, -1, -1) if reverse else range(T)
        for t in order:
            x = videos[:, t, :]
            gi = jnp.dot(x, Wih.T, precision=HIGH) + bih
            gh = jnp.dot(h, Whh.T, precision=HIGH) + bhh
            r = jax.nn.sigmoid(gi[:, :H] + gh[:, :H])
            z = jax.nn.sigmoid(gi[:, H:2 * H] + gh[:, H:2 * H])
            n = jnp.tanh(gi[:, 2 * H:] + r * gh[:, 2 * H:])
            h = (1.0 - z) * n + z * h
            outs[t] = h
        return jnp.stack(outs, axis=1)

    of = run_dir(params["W_ih_f"], params["W_hh_f"], params["b_ih_f"], params["b_hh_f"], False)
    ob = run_dir(params["W_ih_b"], params["W_hh_b"], params["b_ih_b"], params["b_hh_b"], True)
    g = jnp.concatenate([of, ob], axis=-1)

    if gru_pool == "mean":
        gru_out = jnp.stack([jnp.mean(g[i, :lengths_list[i]], axis=0) for i in range(B)])
    else:
        gru_out = jnp.max(g * videos_mask[:, :, None], axis=1)

    gm = g * videos_mask[:, :, None]
    cons = []
    for Wc, bc in params["convs"]:
        wsz = Wc.shape[2]
        y = lax.conv_general_dilated(gm[:, None, :, :], Wc, (1, 1),
                                     ((wsz - 1, wsz - 1), (0, 0)),
                                     dimension_numbers=("NCHW", "OIHW", "NCHW"),
                                     precision=HIGH)
        y = jnp.maximum(y[:, :, :, 0] + bc[None, :, None], 0.0)
        cons.append(jnp.max(y, axis=2))
    con_out = jnp.concatenate(cons, axis=1)
    if concate == "full":
        return jnp.concatenate([gru_out, con_out, videos_origin], axis=1)
    return jnp.concatenate([gru_out, con_out], axis=1)


# ------------------------------------ main ---------------------------------------
if __name__ == "__main__":
    B, T, F = 8, 8, 32           # batch (multiple of 8), seq len, visual_feat_dim
    H = 16                       # visual_rnn_size  -> rnn_output_size = 32
    K = 8                        # visual_kernel_num
    kernel_sizes = (2, 3, 4)     # visual_kernel_sizes

    key = jax.random.PRNGKey(0)
    ks = jax.random.split(key, 16)

    videos = jax.random.normal(ks[0], (B, T, F), jnp.float32)
    videos_origin = jax.random.normal(ks[1], (B, F), jnp.float32)
    lengths_list = [8, 5, 8, 3, 6, 2, 7, 4]
    lengths = jnp.array(lengths_list, jnp.int32)
    videos_mask = (jnp.arange(T)[None, :] < lengths[:, None]).astype(jnp.float32)

    def w(k, shape, scale=0.1):
        return scale * jax.random.normal(k, shape, jnp.float32)

    params = dict(
        W_ih_f=w(ks[2], (3 * H, F)), W_hh_f=w(ks[3], (3 * H, H)),
        b_ih_f=w(ks[4], (3 * H,)), b_hh_f=w(ks[5], (3 * H,)),
        W_ih_b=w(ks[6], (3 * H, F)), W_hh_b=w(ks[7], (3 * H, H)),
        b_ih_b=w(ks[8], (3 * H,)), b_hh_b=w(ks[9], (3 * H,)),
        convs=[(w(ks[10 + i], (K, 1, wsz, 2 * H)), w(ks[13 + i], (K,)))
               for i, wsz in enumerate(kernel_sizes)],
    )

    prep = prepare_params(params, T)

    feats = video_multilevel_encoding(videos, videos_origin, lengths,
                                      videos_mask, prep,
                                      gru_pool="mean", concate="full")
    feats = jax.block_until_ready(feats)
    assert feats.shape == (B, 2 * H + K * len(kernel_sizes) + F), feats.shape

    ref = ref_forward(videos, videos_origin, lengths_list, videos_mask, params,
                      gru_pool="mean", concate="full")
    err = float(jnp.max(jnp.abs(feats - ref)))
    # kernel GEMMs use bf16 operands (f32 accumulation); reference uses HIGHEST
    if not bool(jnp.allclose(feats, ref, atol=3e-2, rtol=3e-2)):
        raise SystemExit("mismatch vs reference, max abs err = %e" % err)

    print("KERNEL_OK")
</pallas_src>

<mosaic_0001>
module attributes {stable_mosaic.version = 11 : i64} {
  func.func @_proj_kernel(%arg0: i32, %arg1: memref<64x32xf32, #tpu.memory_space<vmem>>, %arg2: memref<32x768xbf16, #tpu.memory_space<vmem>>, %arg3: memref<1x768xf32, #tpu.memory_space<vmem>>, %arg4: memref<2x64x384xf32, #tpu.memory_space<vmem>>) attributes {dimension_semantics = [#tpu.dimension_semantics<parallel>], iteration_bounds = array<i64: 1>, scalar_prefetch = 0 : i64, scratch_operands = 0 : i64, tpu.core_type = #tpu.core_type<tc>, window_params = [{transform_indices = @transform_0, window_bounds = array<i64: 64, 32>}, {pipeline_mode = #tpu.pipeline_mode<synchronous>, transform_indices = @transform_1, window_bounds = array<i64: 32, 768>}, {pipeline_mode = #tpu.pipeline_mode<synchronous>, transform_indices = @transform_2, window_bounds = array<i64: 1, 768>}, {transform_indices = @transform_3, window_bounds = array<i64: 2, 64, 384>}]} {
    %c0 = arith.constant 0 : index
    %c0_0 = arith.constant 0 : index
    %0 = vector.load %arg1[%c0, %c0_0] : memref<64x32xf32, #tpu.memory_space<vmem>>, vector<64x32xf32>
    %1 = arith.truncf %0 : vector<64x32xf32> to vector<64x32xbf16>
    %c0_1 = arith.constant 0 : index
    %c0_2 = arith.constant 0 : index
    %2 = vector.load %arg2[%c0_1, %c0_2] : memref<32x768xbf16, #tpu.memory_space<vmem>>, vector<32x768xbf16>
    %cst = arith.constant dense<0.000000e+00> : vector<64x768xf32>
    %3 = tpu.matmul %1, %2, %cst {dimension_numbers = #tpu.dot_dimension_numbers<[1], [0], [0], [1], [0, 0, 1, 1], [], []>} : vector<64x32xbf16>, vector<32x768xbf16>, vector<64x768xf32> -> vector<64x768xf32>
    %c0_3 = arith.constant 0 : index
    %c0_4 = arith.constant 0 : index
    %4 = vector.load %arg3[%c0_3, %c0_4] : memref<1x768xf32, #tpu.memory_space<vmem>>, vector<1x768xf32>
    %5 = vector.broadcast %4 : vector<1x768xf32> to vector<64x768xf32>
    %6 = arith.addf %3, %5 : vector<64x768xf32>
    %7 = vector.extract_strided_slice %6 {offsets = [0, 0], sizes = [64, 384], strides = [1, 1]} : vector<64x768xf32> to vector<64x384xf32>
    %c0_5 = arith.constant 0 : index
    %c0_6 = arith.constant 0 : index
    %c0_7 = arith.constant 0 : index
    %8 = vector.load %arg4[%c0_5, %c0_6, %c0_7] : memref<2x64x384xf32, #tpu.memory_space<vmem>>, vector<1x64x384xf32>
    %9 = vector.shape_cast %8 : vector<1x64x384xf32> to vector<64x384xf32>
    %10 = vector.shape_cast %7 : vector<64x384xf32> to vector<1x64x384xf32>
    tpu.vector_store %arg4[%c0_5, %c0_6, %c0_7], %10 {strides = array<i32>} : memref<2x64x384xf32, #tpu.memory_space<vmem>>, vector<1x64x384xf32>,
    %11 = vector.extract_strided_slice %6 {offsets = [0, 384], sizes = [64, 384], strides = [1, 1]} : vector<64x768xf32> to vector<64x384xf32>
    %c1 = arith.constant 1 : index
    %c0_8 = arith.constant 0 : index
    %c0_9 = arith.constant 0 : index
    %12 = vector.load %arg4[%c1, %c0_8, %c0_9] : memref<2x64x384xf32, #tpu.memory_space<vmem>>, vector<1x64x384xf32>
    %13 = vector.shape_cast %12 : vector<1x64x384xf32> to vector<64x384xf32>
    %14 = vector.shape_cast %11 : vector<64x384xf32> to vector<1x64x384xf32>
    tpu.vector_store %arg4[%c1, %c0_8, %c0_9], %14 {strides = array<i32>} : memref<2x64x384xf32, #tpu.memory_space<vmem>>, vector<1x64x384xf32>,
    return
  }
  func.func @transform_0(%arg0: i32) -> (i32, i32) {
    %c0_i32 = arith.constant 0 : i32
    %c0_i32_0 = arith.constant 0 : i32
    return %arg0, %c0_i32 : i32, i32
  }
  func.func @transform_1(%arg0: i32) -> (i32, i32) {
    %c0_i32 = arith.constant 0 : i32
    %c0_i32_0 = arith.constant 0 : i32
    %c0_i32_1 = arith.constant 0 : i32
    return %c0_i32, %c0_i32_0 : i32, i32
  }
  func.func @transform_2(%arg0: i32) -> (i32, i32) {
    %c0_i32 = arith.constant 0 : i32
    %c0_i32_0 = arith.constant 0 : i32
    %c0_i32_1 = arith.constant 0 : i32
    return %c0_i32, %c0_i32_0 : i32, i32
  }
  func.func @transform_3(%arg0: i32) -> (i32, i32, i32) {
    %c0_i32 = arith.constant 0 : i32
    %c0_i32_0 = arith.constant 0 : i32
    %c0_i32_1 = arith.constant 0 : i32
    return %c0_i32, %arg0, %c0_i32_0 : i32, i32, i32
  }
}

</mosaic_0001>

<llo_original>
// kernel: tpu_custom_call.1
$region0: #{tpu_custom_call.1}
  #allocation0 [shape = 'u32[]', space=smem, size = 0x4, offset = 0x4, fixed_abs, tag = 'smem constant byte address 0x4 - core index']
  #allocation1 [shape = 'u32[144,128]{1,0:T(1,128)}', space=vmem, size = 0x12000, scoped, tag = 'internal scratch']
  %s0 = inlined_call_operand.vmem [shape: f32[64,32], index: 0, kind: input, shape index: {}]
  %s1 = inlined_call_operand.vmem [shape: bf16[32,768], index: 1, kind: input, shape index: {}]
  %s2 = inlined_call_operand.hbm [shape: f32[1,768], index: 2, kind: input, shape index: {}]
  %s3 = inlined_call_operand.hbm [shape: f32[2,64,384], index: 3, kind: output, shape index: {}]
  %s4 = sld [smem:[#allocation0]]
  $region26: #{tpu_custom_call.1} parent=0
    _
  %s6 = ssub.s32 1, %s4
  %s7 = scalar_select 0, %s6, %s4
  $region1: #{tpu_custom_call.1} parent=0
    #allocation2 [shape = 'u8[3072]{0}', space=vmem, size = 0xc00, scoped, tag = 'input window, operand 2, single buffered']
    #allocation3 [shape = 's32[1]{0}', space=sflag, size = 0x4, scoped, tag = 'scoped memory for tpu_custom_call.1']
    #allocation4 [shape = 's32[1]{0}', space=sflag, size = 0x4, scoped, tag = 'scoped memory for tpu_custom_call.1']
    #allocation5 [shape = 'u8[196608]{0}', space=vmem, size = 0x30000, scoped, tag = 'output window, operand 0, single buffered']
    %8 = vsyncpa [#allocation3], 0
    %9 = vsyncpa [#allocation4], 0
    // Predicated region
    $region2: #{tpu_custom_call.1} parent=1 // pred_check
      _
    $region3: #{tpu_custom_call.1} parent=1 // pred_check_branch
      %11 = sbr.rel (0) target = $region5
    $region4: #{tpu_custom_call.1} parent=1 // pred_region
      _
    $region5: #{tpu_custom_call.1} parent=1 // pred_fallthru
      _
    // Predicated region
    $region6: #{tpu_custom_call.1} parent=1 // pred_check
      _
    $region7: #{tpu_custom_call.1} parent=1 // pred_check_branch
      %13 = sbr.rel (0) target = $region9
    $region8: #{tpu_custom_call.1} parent=1 // pred_region
      _
    $region9: #{tpu_custom_call.1} parent=1 // pred_fallthru
      _
    // Predicated region
    $region10: #{tpu_custom_call.1} parent=1 // pred_check
      _
    $region11: #{tpu_custom_call.1} parent=1 // pred_check_branch
      %15 = sbr.rel (0) target = $region13
    $region12: #{tpu_custom_call.1} parent=1 // pred_region
      %s17 = ssub.s32 96, 96
      %18 = vsyncadd [#allocation3], %s17
      %s20 = sshll.u32 [#allocation2], 4
      %s21 = int_to_ptr.vmem [resolvable:$true] %s20
      %23 = dma.hbm_to_vmem [thread:$0]  %s2, 96, %s21, [#allocation3]
    $region13: #{tpu_custom_call.1} parent=1 // pred_fallthru
      _
    // Predicated region
    $region14: #{tpu_custom_call.1} parent=1 // pred_check
      _
    $region15: #{tpu_custom_call.1} parent=1 // pred_check_branch
      %25 = sbr.rel (0) target = $region17
    $region16: #{tpu_custom_call.1} parent=1 // pred_region
      %26 = dma.done [#allocation3], 96
    $region17: #{tpu_custom_call.1} parent=1 // pred_fallthru
      _
    %v28 = vld [vmem:[%s0] sm:$0xff]
    %v29 = vld [vmem:[%s0 + $0x8] sm:$0xff]
    %v30 = vld [vmem:[%s0 + $0x10] sm:$0xff]
    %v31 = vld [vmem:[%s0 + $0x18] sm:$0xff]
    %v32 = vld [vmem:[%s0 + $0x20] sm:$0xff]
    %v33 = vld [vmem:[%s0 + $0x28] sm:$0xff]
    %v34 = vld [vmem:[%s0 + $0x30] sm:$0xff]
    %v35 = vld [vmem:[%s0 + $0x38] sm:$0xff]
    %v36 = vpack.c.bf16 %v29, %v28
    %v37 = vpack.c.bf16 %v31, %v30
    %v38 = vpack.c.bf16 %v33, %v32
    %v39 = vpack.c.bf16 %v35, %v34
    %v40 = vld [vmem:[%s1] sm:$0xff]
    %v41 = vld [vmem:[%s1 + $0x8] sm:$0xff]
    %v42 = vld [vmem:[%s1 + $0x10] sm:$0xff]
    %v43 = vld [vmem:[%s1 + $0x18] sm:$0xff]
    %v44 = vld [vmem:[%s1 + $0x20] sm:$0xff]
    %v45 = vld [vmem:[%s1 + $0x28] sm:$0xff]
    %v46 = vld [vmem:[%s1 + $0x30] sm:$0xff]
    %v47 = vld [vmem:[%s1 + $0x38] sm:$0xff]
    %v48 = vld [vmem:[%s1 + $0x40] sm:$0xff]
    %v49 = vld [vmem:[%s1 + $0x48] sm:$0xff]
    %v50 = vld [vmem:[%s1 + $0x50] sm:$0xff]
    %v51 = vld [vmem:[%s1 + $0x58] sm:$0xff]
    %v52 = vld [vmem:[#allocation2] sm:$0x3f]
    %v54 = vlaneseq
    %v55 = vshrl.u32 %v54, 7
    %v56 = vsub.s32 0, %v55
    %v57 = vrot.slane %v52, %v56
    %v58 = vlaneseq
    %v59 = vshrl.u32 %v58, 7
    %v60 = vsub.s32 1, %v59
    %v61 = vrot.slane %v52, %v60
    %v62 = vlaneseq
    %v63 = vshrl.u32 %v62, 7
    %v64 = vsub.s32 2, %v63
    %v65 = vrot.slane %v52, %v64
    %v66 = vlaneseq
    %v67 = vshrl.u32 %v66, 7
    %v68 = vsub.s32 3, %v67
    %v69 = vrot.slane %v52, %v68
    %v70 = vlaneseq
    %v71 = vshrl.u32 %v70, 7
    %v72 = vsub.s32 4, %v71
    %v73 = vrot.slane %v52, %v72
    %v74 = vlaneseq
    %v75 = vshrl.u32 %v74, 7
    %v76 = vsub.s32 5, %v75
    %v77 = vrot.slane %v52, %v76
    %v96 = vunpack.c.l.b16 %v40
    %v97 = vunpack.c.h.b16 %v40
    %v98 = vunpack.c.l.b16 %v41
    %v99 = vunpack.c.h.b16 %v41
    %v100 = vunpack.c.l.b16 %v42
    %v101 = vunpack.c.h.b16 %v42
    %v102 = vunpack.c.l.b16 %v43
    %v103 = vunpack.c.h.b16 %v43
    %v104 = vunpack.c.l.b16 %v44
    %v105 = vunpack.c.h.b16 %v44
    %v106 = vunpack.c.l.b16 %v45
    %v107 = vunpack.c.h.b16 %v45
    %v108 = vunpack.c.l.b16 %v46
    %v109 = vunpack.c.h.b16 %v46
    %v110 = vunpack.c.l.b16 %v47
    %v111 = vunpack.c.h.b16 %v47
    %v112 = vunpack.c.l.b16 %v48
    %v113 = vunpack.c.h.b16 %v48
    %v114 = vunpack.c.l.b16 %v49
    %v115 = vunpack.c.h.b16 %v49
    %v116 = vunpack.c.l.b16 %v50
    %v117 = vunpack.c.h.b16 %v50
    %v118 = vunpack.c.l.b16 %v51
    %v119 = vunpack.c.h.b16 %v51
    %v120 = vpack.c.b16 %v102, %v96
    %v121 = vpack.c.b16 %v103, %v97
    %v122 = vpack.c.b16 %v104, %v98
    %v123 = vpack.c.b16 %v105, %v99
    %v124 = vpack.c.b16 %v106, %v100
    %v125 = vpack.c.b16 %v107, %v101
    %v126 = vpack.c.b16 %v114, %v108
    %v127 = vpack.c.b16 %v115, %v109
    %v128 = vpack.c.b16 %v116, %v110
    %v129 = vpack.c.b16 %v117, %v111
    %v130 = vpack.c.b16 %v118, %v112
    %v131 = vpack.c.b16 %v119, %v113
    %vm144 = vcmask 261120
    %v146 = vsel %vm144, %v36, 0
    %v149 = vsel %vm144, %v37, 0
    %v152 = vsel %vm144, %v38, 0
    %v155 = vsel %vm144, %v39, 0
    %157 = vmatprep.subr.bf16.mxu0 0
    %158 = vmatpush1.bf16.msra.mxu0 0
    %159 = vmatprep.subr.bf16.mxu0 0
    %160 = vmatpush1.bf16.msra.mxu0 0
    %161 = vmatprep.subr.bf16.mxu0 0
    %162 = vmatpush1.bf16.msra.mxu0 0
    %163 = vmatprep.subr.bf16.mxu0 0
    %164 = vmatpush1.bf16.msra.mxu0 0
    %165 = vmatprep.subr.bf16.mxu0 0
    %166 = vmatpush1.bf16.msra.mxu0 0
    %167 = vmatprep.subr.bf16.mxu0 0
    %168 = vmatpush1.bf16.msra.mxu0 0
    %169 = vmatprep.subr.bf16.mxu0 %v127
    %170 = vmatpush1.bf16.msra.mxu0 %v126
    %171 = vmatprep.subr.bf16.mxu0 %v121
    %172 = vmatpush1.bf16.msra.mxu0 %v120
    %173 = vmatprep.subr.bf16.mxu0 0
    %174 = vmatpush2.bf16.msra.mxu0 0
    %175 = vmatprep.subr.bf16.mxu0 0
    %176 = vmatpush2.bf16.msra.mxu0 0
    %177 = vmatprep.subr.bf16.mxu0 0
    %178 = vmatpush2.bf16.msra.mxu0 0
    %179 = vmatprep.subr.bf16.mxu0 0
    %180 = vmatpush2.bf16.msra.mxu0 0
    %181 = vmatprep.subr.bf16.mxu0 0
    %182 = vmatpush2.bf16.msra.mxu0 0
    %183 = vmatprep.subr.bf16.mxu0 0
    %184 = vmatpush2.bf16.msra.mxu0 0
    %185 = vmatprep.subr.bf16.mxu0 0
    %186 = vmatpush2.bf16.msra.mxu0 0
    %187 = vmatprep.subr.bf16.mxu0 0
    %188 = vmatpush2.bf16.msra.mxu0 0
    %189 = vmatprep.mubr.bf16.mxu0 0
    %190 = vmatmul.mubr.bf16.gmra.mxu0 %v146
    %v191 = vpop.f32.mrf.mxu0
    %v192 = vadd.f32 %v57, %v191
    %v193 = vpop.f32.mrf.mxu0
    %v194 = vadd.f32 %v61, %v193
    %v195 = vpop.f32.mrf.mxu0
    %v196 = vadd.f32 %v57, %v195
    %v197 = vpop.f32.mrf.mxu0
    %v198 = vadd.f32 %v61, %v197
    %199 = vmatprep.mubr.bf16.mxu0 0
    %200 = vmatmul.mubr.bf16.gmra.mxu0 %v149
    %v201 = vpop.f32.mrf.mxu0
    %v202 = vadd.f32 %v57, %v201
    %v203 = vpop.f32.mrf.mxu0
    %v204 = vadd.f32 %v61, %v203
    %v205 = vpop.f32.mrf.mxu0
    %v206 = vadd.f32 %v57, %v205
    %v207 = vpop.f32.mrf.mxu0
    %v208 = vadd.f32 %v61, %v207
    %209 = vmatprep.mubr.bf16.mxu0 0
    %210 = vmatmul.mubr.bf16.gmra.mxu0 %v152
    %v211 = vpop.f32.mrf.mxu0
    %v212 = vadd.f32 %v57, %v211
    %v213 = vpop.f32.mrf.mxu0
    %v214 = vadd.f32 %v61, %v213
    %v215 = vpop.f32.mrf.mxu0
    %v216 = vadd.f32 %v57, %v215
    %v217 = vpop.f32.mrf.mxu0
    %v218 = vadd.f32 %v61, %v217
    %219 = vmatprep.mubr.bf16.mxu0 0
    %220 = vmatmul.mubr.bf16.gmra.mxu0 %v155
    %v221 = vpop.f32.mrf.mxu0
    %v222 = vadd.f32 %v57, %v221
    %v223 = vpop.f32.mrf.mxu0
    %v224 = vadd.f32 %v61, %v223
    %v225 = vpop.f32.mrf.mxu0
    %v226 = vadd.f32 %v57, %v225
    %v227 = vpop.f32.mrf.mxu0
    %v228 = vadd.f32 %v61, %v227
    %229 = vdwg.mxu0
    %230 = vmatprep.subr.bf16.mxu0 0
    %231 = vmatpush1.bf16.msra.mxu0 0
    %232 = vmatprep.subr.bf16.mxu0 0
    %233 = vmatpush1.bf16.msra.mxu0 0
    %234 = vmatprep.subr.bf16.mxu0 0
    %235 = vmatpush1.bf16.msra.mxu0 0
    %236 = vmatprep.subr.bf16.mxu0 0
    %237 = vmatpush1.bf16.msra.mxu0 0
    %238 = vmatprep.subr.bf16.mxu0 0
    %239 = vmatpush1.bf16.msra.mxu0 0
    %240 = vmatprep.subr.bf16.mxu0 0
    %241 = vmatpush1.bf16.msra.mxu0 0
    %242 = vmatprep.subr.bf16.mxu0 %v129
    %243 = vmatpush1.bf16.msra.mxu0 %v128
    %244 = vmatprep.subr.bf16.mxu0 %v123
    %245 = vmatpush1.bf16.msra.mxu0 %v122
    %246 = vmatprep.subr.bf16.mxu0 0
    %247 = vmatpush2.bf16.msra.mxu0 0
    %248 = vmatprep.subr.bf16.mxu0 0
    %249 = vmatpush2.bf16.msra.mxu0 0
    %250 = vmatprep.subr.bf16.mxu0 0
    %251 = vmatpush2.bf16.msra.mxu0 0
    %252 = vmatprep.subr.bf16.mxu0 0
    %253 = vmatpush2.bf16.msra.mxu0 0
    %254 = vmatprep.subr.bf16.mxu0 0
    %255 = vmatpush2.bf16.msra.mxu0 0
    %256 = vmatprep.subr.bf16.mxu0 0
    %257 = vmatpush2.bf16.msra.mxu0 0
    %258 = vmatprep.subr.bf16.mxu0 0
    %259 = vmatpush2.bf16.msra.mxu0 0
    %260 = vmatprep.subr.bf16.mxu0 0
    %261 = vmatpush2.bf16.msra.mxu0 0
    %262 = vmatprep.mubr.bf16.mxu0 0
    %263 = vmatmul.mubr.bf16.gmra.mxu0 %v146
    %v264 = vpop.f32.mrf.mxu0
    %v265 = vadd.f32 %v65, %v264
    %v266 = vpop.f32.mrf.mxu0
    %v267 = vadd.f32 %v69, %v266
    %v268 = vpop.f32.mrf.mxu0
    %v269 = vadd.f32 %v65, %v268
    %v270 = vpop.f32.mrf.mxu0
    %v271 = vadd.f32 %v69, %v270
    %272 = vmatprep.mubr.bf16.mxu0 0
    %273 = vmatmul.mubr.bf16.gmra.mxu0 %v149
    %v274 = vpop.f32.mrf.mxu0
    %v275 = vadd.f32 %v65, %v274
    %v276 = vpop.f32.mrf.mxu0
    %v277 = vadd.f32 %v69, %v276
    %v278 = vpop.f32.mrf.mxu0
    %v279 = vadd.f32 %v65, %v278
    %v280 = vpop.f32.mrf.mxu0
    %v281 = vadd.f32 %v69, %v280
    %282 = vmatprep.mubr.bf16.mxu0 0
    %283 = vmatmul.mubr.bf16.gmra.mxu0 %v152
    %v284 = vpop.f32.mrf.mxu0
    %v285 = vadd.f32 %v65, %v284
    %v286 = vpop.f32.mrf.mxu0
    %v287 = vadd.f32 %v69, %v286
    %v288 = vpop.f32.mrf.mxu0
    %v289 = vadd.f32 %v65, %v288
    %v290 = vpop.f32.mrf.mxu0
    %v291 = vadd.f32 %v69, %v290
    %292 = vmatprep.mubr.bf16.mxu0 0
    %293 = vmatmul.mubr.bf16.gmra.mxu0 %v155
    %v294 = vpop.f32.mrf.mxu0
    %v295 = vadd.f32 %v65, %v294
    %v296 = vpop.f32.mrf.mxu0
    %v297 = vadd.f32 %v69, %v296
    %v298 = vpop.f32.mrf.mxu0
    %v299 = vadd.f32 %v65, %v298
    %v300 = vpop.f32.mrf.mxu0
    %v301 = vadd.f32 %v69, %v300
    %302 = vdwg.mxu0
    %303 = vmatprep.subr.bf16.mxu0 0
    %304 = vmatpush1.bf16.msra.mxu0 0
    %305 = vmatprep.subr.bf16.mxu0 0
    %306 = vmatpush1.bf16.msra.mxu0 0
    %307 = vmatprep.subr.bf16.mxu0 0
    %308 = vmatpush1.bf16.msra.mxu0 0
    %309 = vmatprep.subr.bf16.mxu0 0
    %310 = vmatpush1.bf16.msra.mxu0 0
    %311 = vmatprep.subr.bf16.mxu0 0
    %312 = vmatpush1.bf16.msra.mxu0 0
    %313 = vmatprep.subr.bf16.mxu0 0
    %314 = vmatpush1.bf16.msra.mxu0 0
    %315 = vmatprep.subr.bf16.mxu0 %v131
    %316 = vmatpush1.bf16.msra.mxu0 %v130
    %317 = vmatprep.subr.bf16.mxu0 %v125
    %318 = vmatpush1.bf16.msra.mxu0 %v124
    %319 = vmatprep.subr.bf16.mxu0 0
    %320 = vmatpush2.bf16.msra.mxu0 0
    %321 = vmatprep.subr.bf16.mxu0 0
    %322 = vmatpush2.bf16.msra.mxu0 0
    %323 = vmatprep.subr.bf16.mxu0 0
    %324 = vmatpush2.bf16.msra.mxu0 0
    %325 = vmatprep.subr.bf16.mxu0 0
    %326 = vmatpush2.bf16.msra.mxu0 0
    %327 = vmatprep.subr.bf16.mxu0 0
    %328 = vmatpush2.bf16.msra.mxu0 0
    %329 = vmatprep.subr.bf16.mxu0 0
    %330 = vmatpush2.bf16.msra.mxu0 0
    %331 = vmatprep.subr.bf16.mxu0 0
    %332 = vmatpush2.bf16.msra.mxu0 0
    %333 = vmatprep.subr.bf16.mxu0 0
    %334 = vmatpush2.bf16.msra.mxu0 0
    %335 = vmatprep.mubr.bf16.mxu0 0
    %336 = vmatmul.mubr.bf16.gmra.mxu0 %v146
    %v337 = vpop.f32.mrf.mxu0
    %v338 = vadd.f32 %v73, %v337
    %v339 = vpop.f32.mrf.mxu0
    %v340 = vadd.f32 %v77, %v339
    %v341 = vpop.f32.mrf.mxu0
    %v342 = vadd.f32 %v73, %v341
    %v343 = vpop.f32.mrf.mxu0
    %v344 = vadd.f32 %v77, %v343
    %345 = vmatprep.mubr.bf16.mxu0 0
    %346 = vmatmul.mubr.bf16.gmra.mxu0 %v149
    %v347 = vpop.f32.mrf.mxu0
    %v348 = vadd.f32 %v73, %v347
    %v349 = vpop.f32.mrf.mxu0
    %v350 = vadd.f32 %v77, %v349
    %v351 = vpop.f32.mrf.mxu0
    %v352 = vadd.f32 %v73, %v351
    %v353 = vpop.f32.mrf.mxu0
    %v354 = vadd.f32 %v77, %v353
    %355 = vmatprep.mubr.bf16.mxu0 0
    %356 = vmatmul.mubr.bf16.gmra.mxu0 %v152
    %v357 = vpop.f32.mrf.mxu0
    %v358 = vadd.f32 %v73, %v357
    %v359 = vpop.f32.mrf.mxu0
    %v360 = vadd.f32 %v77, %v359
    %v361 = vpop.f32.mrf.mxu0
    %v362 = vadd.f32 %v73, %v361
    %v363 = vpop.f32.mrf.mxu0
    %v364 = vadd.f32 %v77, %v363
    %365 = vmatprep.mubr.bf16.mxu0 0
    %366 = vmatmul.mubr.bf16.gmra.mxu0 %v155
    %v367 = vpop.f32.mrf.mxu0
    %v368 = vadd.f32 %v73, %v367
    %v369 = vpop.f32.mrf.mxu0
    %v370 = vadd.f32 %v77, %v369
    %v371 = vpop.f32.mrf.mxu0
    %v372 = vadd.f32 %v73, %v371
    %v373 = vpop.f32.mrf.mxu0
    %v374 = vadd.f32 %v77, %v373
    %375 = vdwg.mxu0
    %376 = vst [vmem:[#allocation5] sm:$0xff] %v192
    %377 = vst [vmem:[#allocation5 + $0x8] sm:$0xff] %v194
    %378 = vst [vmem:[#allocation5 + $0x10] sm:$0xff] %v265
    %379 = vst [vmem:[#allocation5 + $0x18] sm:$0xff] %v196
    %380 = vst [vmem:[#allocation5 + $0x20] sm:$0xff] %v198
    %381 = vst [vmem:[#allocation5 + $0x28] sm:$0xff] %v269
    %382 = vst [vmem:[#allocation5 + $0x30] sm:$0xff] %v202
    %383 = vst [vmem:[#allocation5 + $0x38] sm:$0xff] %v204
    %384 = vst [vmem:[#allocation5 + $0x40] sm:$0xff] %v275
    %385 = vst [vmem:[#allocation5 + $0x48] sm:$0xff] %v206
    %386 = vst [vmem:[#allocation5 + $0x50] sm:$0xff] %v208
    %387 = vst [vmem:[#allocation5 + $0x58] sm:$0xff] %v279
    %388 = vst [vmem:[#allocation5 + $0x60] sm:$0xff] %v212
    %389 = vst [vmem:[#allocation5 + $0x68] sm:$0xff] %v214
    %390 = vst [vmem:[#allocation5 + $0x70] sm:$0xff] %v285
    %391 = vst [vmem:[#allocation5 + $0x78] sm:$0xff] %v216
    %392 = vst [vmem:[#allocation5 + $0x80] sm:$0xff] %v218
    %393 = vst [vmem:[#allocation5 + $0x88] sm:$0xff] %v289
    %394 = vst [vmem:[#allocation5 + $0x90] sm:$0xff] %v222
    %395 = vst [vmem:[#allocation5 + $0x98] sm:$0xff] %v224
    %396 = vst [vmem:[#allocation5 + $0xa0] sm:$0xff] %v295
    %397 = vst [vmem:[#allocation5 + $0xa8] sm:$0xff] %v226
    %398 = vst [vmem:[#allocation5 + $0xb0] sm:$0xff] %v228
    %399 = vst [vmem:[#allocation5 + $0xb8] sm:$0xff] %v299
    %s400 = scalar_lea.vmem [#allocation5], 192
    %401 = vst [vmem:[%s400] sm:$0xff] %v267
    %402 = vst [vmem:[%s400 + $0x8] sm:$0xff] %v338
    %403 = vst [vmem:[%s400 + $0x10] sm:$0xff] %v340
    %404 = vst [vmem:[%s400 + $0x18] sm:$0xff] %v271
    %405 = vst [vmem:[%s400 + $0x20] sm:$0xff] %v342
    %406 = vst [vmem:[%s400 + $0x28] sm:$0xff] %v344
    %407 = vst [vmem:[%s400 + $0x30] sm:$0xff] %v277
    %408 = vst [vmem:[%s400 + $0x38] sm:$0xff] %v348
    %409 = vst [vmem:[%s400 + $0x40] sm:$0xff] %v350
    %410 = vst [vmem:[%s400 + $0x48] sm:$0xff] %v281
    %411 = vst [vmem:[%s400 + $0x50] sm:$0xff] %v352
    %412 = vst [vmem:[%s400 + $0x58] sm:$0xff] %v354
    %413 = vst [vmem:[%s400 + $0x60] sm:$0xff] %v287
    %414 = vst [vmem:[%s400 + $0x68] sm:$0xff] %v358
    %415 = vst [vmem:[%s400 + $0x70] sm:$0xff] %v360
    %416 = vst [vmem:[%s400 + $0x78] sm:$0xff] %v291
    %417 = vst [vmem:[%s400 + $0x80] sm:$0xff] %v362
    %418 = vst [vmem:[%s400 + $0x88] sm:$0xff] %v364
    %419 = vst [vmem:[%s400 + $0x90] sm:$0xff] %v297
    %420 = vst [vmem:[%s400 + $0x98] sm:$0xff] %v368
    %421 = vst [vmem:[%s400 + $0xa0] sm:$0xff] %v370
    %422 = vst [vmem:[%s400 + $0xa8] sm:$0xff] %v301
    %423 = vst [vmem:[%s400 + $0xb0] sm:$0xff] %v372
    %424 = vst [vmem:[%s400 + $0xb8] sm:$0xff] %v374
    // Predicated region
    $region18: #{tpu_custom_call.1} parent=1 // pred_check
      _
    $region19: #{tpu_custom_call.1} parent=1 // pred_check_branch
      %426 = sbr.rel (0) target = $region21
    $region20: #{tpu_custom_call.1} parent=1 // pred_region
      %s428 = ssub.s32 6144, 6144
      %429 = vsyncadd [#allocation4], %s428
      %s430 = sshll.u32 [#allocation5], 4
      %s431 = int_to_ptr.vmem [resolvable:$true] %s430
      %436 = dma.vmem_to_hbm [thread:$0]  %s431, 6144, %s3, [#allocation4], 384, 384, 24
    $region21: #{tpu_custom_call.1} parent=1 // pred_fallthru
      _
    // Predicated region
    $region22: #{tpu_custom_call.1} parent=1 // pred_check
      _
    $region23: #{tpu_custom_call.1} parent=1 // pred_check_branch
      %438 = sbr.rel (0) target = $region25
    $region24: #{tpu_custom_call.1} parent=1 // pred_region
      %439 = dma.done [#allocation4], 6144
    $region25: #{tpu_custom_call.1} parent=1 // pred_fallthru
      _
    %440 = vsyncpa [#allocation3], 1
    %441 = vsyncpa [#allocation4], 1

</llo_original>
